<compile_context>
chip_gen: v7x
topology: tpu7x:2x2x1
jax: 0.10.0
libtpu: 0.0.40
codegen_flags: <defaults>
</compile_context>

<pallas_src>
import functools

import numpy as np

import jax
import jax.numpy as jnp
from jax.experimental import pallas as pl
from jax.experimental.pallas import tpu as pltpu

_SUB = 8      # sublanes per vreg
_BPR = 128    # batch elements folded into one reshaped row (one lane tile)


def _pinball_kernel(p_ref, t_ref, e_ref, q_ref, out_ref, acc_ref, *,
                    rows_total, block_rows, lanes, tiles_per_core,
                    compute_bf16):
    """One grid step: partial pinball sums for `block_rows` reshaped rows."""
    core = pl.program_id(0)
    step = pl.program_id(1)
    tile = core * tiles_per_core + step          # un-clamped logical tile id

    @pl.when(step == 0)
    def _init():
        acc_ref[...] = jnp.zeros_like(acc_ref)

    groups = block_rows // _SUB

    # --- expand target along lanes with the (otherwise idle) MXU -----------
    # e_ref is a 0/1 bf16 matrix with E[k, Q*k + j] = 1, hence
    #   dot(t, E)[r, m] == t[r, m // Q]   (exact: one nonzero term per column).
    e_mat = e_ref[...]                           # (128, lanes) bf16
    tgt = t_ref[...]                             # (block_rows, 128)
    if compute_bf16:
        t_exp = jnp.dot(tgt, e_mat, preferred_element_type=jnp.float32)
        t_exp = t_exp.astype(jnp.bfloat16)       # exact (values are bf16)
        preds = p_ref[...]                       # keep bf16 (VPU bf16 path)
    else:
        # Split f32 targets into 3 exact bf16 pieces; three plain bf16 matmuls
        # then reproduce the f32 values to ~2^-24 without relying on f32
        # matmul precision plumbing.
        t32 = tgt.astype(jnp.float32)
        hi = t32.astype(jnp.bfloat16)
        r1 = t32 - hi.astype(jnp.float32)
        mid = r1.astype(jnp.bfloat16)
        lo = (r1 - mid.astype(jnp.float32)).astype(jnp.bfloat16)
        t_exp = (jnp.dot(hi, e_mat, preferred_element_type=jnp.float32) +
                 jnp.dot(mid, e_mat, preferred_element_type=jnp.float32) +
                 jnp.dot(lo, e_mat, preferred_element_type=jnp.float32))
        preds = p_ref[...].astype(jnp.float32)

    # --- pinball: max((q-1)e, qe), e = t - p   ==   relu(d) - q*d, d = p - t
    p3 = preds.reshape(groups, _SUB, lanes)
    t3 = t_exp.reshape(groups, _SUB, lanes)
    q = q_ref[...]                               # (8, lanes) lane-periodic q
    d = p3 - t3
    pin = jnp.maximum(d, jnp.zeros_like(d)) - q * d   # (groups, 8, lanes)

    rem = rows_total - tile * block_rows         # valid rows in this tile
    is_full = rem >= block_rows

    @pl.when(is_full)                            # steady state: no mask ops
    def _acc_full():
        acc_ref[...] += pin.astype(jnp.float32).sum(axis=0)

    @pl.when(jnp.logical_not(is_full))           # ragged / surplus tile only
    def _acc_edge():
        g_id = jax.lax.broadcasted_iota(jnp.int32, pin.shape, 0)
        s_id = jax.lax.broadcasted_iota(jnp.int32, pin.shape, 1)
        row = g_id * _SUB + s_id
        pin_m = jnp.where(row < rem, pin, jnp.zeros_like(pin))
        acc_ref[...] += pin_m.astype(jnp.float32).sum(axis=0)

    @pl.when(step == tiles_per_core - 1)
    def _finalize():
        out_ref[0] = acc_ref[...]                # lane-dense partial sums


def _quantile_loss_reference(preds, target, quantiles):
    """Direct transcription of the PyTorch forward (1-D target path)."""
    target = jnp.reshape(target, (-1,)).astype(jnp.float32)
    preds = preds.astype(jnp.float32)
    losses = []
    for i, q in enumerate(quantiles):
        errors = target - preds[:, i]
        losses.append(jnp.maximum((q - 1.0) * errors, q * errors)[:, None])
    return jnp.mean(jnp.sum(jnp.concatenate(losses, axis=1), axis=1))


def quantile_loss(preds, target, quantiles, *, block_rows=None,
                  block_bytes=6 * 1024 * 1024, num_cores=2,
                  min_kernel_batch=65536, bf16_math=None):
    """QuantileLoss forward: preds (B, Q), target (B,) or (B, 1)."""
    quantiles = tuple(float(x) for x in quantiles)
    if target.ndim == 2 and target.shape[-1] == 1:
        target = target[:, 0]
    if target.ndim != 1:
        # TODO(synk): PyTorch's 2-D-target broadcast branch (target (B,T) vs
        # preds[..., i]) is a degenerate path and is not implemented.
        raise NotImplementedError("only 1-D (or (B, 1)) targets are supported")
    B, Q = preds.shape
    assert target.shape[0] == B

    # Latency-bound / unaligned regime: a fused XLA elementwise reduce wins.
    use_kernel = (B % _BPR == 0) and (B // _BPR >= _SUB) and (B >= min_kernel_batch)
    if not use_kernel:
        return _quantile_loss_reference(preds, target, quantiles)

    rows = B // _BPR                       # reshaped rows (128 batch elems each)
    lanes = _BPR * Q                       # lane width of a reshaped row
    compute_bf16 = ((preds.dtype == jnp.bfloat16) if bf16_math is None
                    else bool(bf16_math))
    cdt = jnp.bfloat16 if compute_bf16 else jnp.float32

    itemsize = jnp.dtype(preds.dtype).itemsize
    if block_rows is None:
        block_rows = (block_bytes // (lanes * itemsize)) // _SUB * _SUB
    block_rows = int(max(_SUB, min(block_rows, (rows // _SUB) * _SUB)))
    num_tiles = pl.cdiv(rows, block_rows)
    nc = max(1, int(num_cores))
    tpc = pl.cdiv(num_tiles, nc)           # cdiv: never drop a v7x core

    # Free row-major views -- no extra HBM pass over preds or target.
    preds2 = preds.reshape(rows, lanes)
    target2 = target.reshape(rows, _BPR)
    if compute_bf16 and target2.dtype != jnp.bfloat16:
        target2 = target2.astype(jnp.bfloat16)

    # 0/1 lane-expansion matrix: E[k, Q*k + j] = 1.
    e_np = np.zeros((_BPR, lanes), dtype=np.float32)
    ridx = np.arange(_BPR)
    for j in range(Q):
        e_np[ridx, ridx * Q + j] = 1.0
    e_mat = jnp.asarray(e_np, dtype=jnp.bfloat16)

    # Lane-periodic quantile constants: lane m holds quantiles[m % Q].
    q_np = np.broadcast_to(np.tile(np.asarray(quantiles, np.float32), _BPR),
                           (_SUB, lanes)).copy()
    q_lane = jnp.asarray(q_np, dtype=cdt)

    kernel = functools.partial(
        _pinball_kernel, rows_total=rows, block_rows=block_rows, lanes=lanes,
        tiles_per_core=tpc, compute_bf16=compute_bf16)

    def row_map(c, t):
        return (jnp.minimum(c * tpc + t, num_tiles - 1), 0)

    partials = pl.pallas_call(
        kernel,
        out_shape=jax.ShapeDtypeStruct((nc, _SUB, lanes), jnp.float32),
        grid=(nc, tpc),
        in_specs=[
            pl.BlockSpec((block_rows, lanes), row_map),          # preds view
            pl.BlockSpec((block_rows, _BPR), row_map),            # target view
            pl.BlockSpec((_BPR, lanes), lambda c, t: (0, 0)),     # E (resident)
            pl.BlockSpec((_SUB, lanes), lambda c, t: (0, 0)),     # q (resident)
        ],
        out_specs=pl.BlockSpec((1, _SUB, lanes), lambda c, t: (c, 0, 0)),
        scratch_shapes=[pltpu.VMEM((_SUB, lanes), jnp.float32)],
        compiler_params=pltpu.CompilerParams(
            dimension_semantics=("parallel", "arbitrary"),
            vmem_limit_bytes=32 * 1024 * 1024),
    )(preds2, target2, e_mat, q_lane)

    # mean over batch of (sum over quantiles) == total_sum / B
    return jnp.sum(partials) * (1.0 / B)


if __name__ == "__main__":
    quantiles = [0.1, 0.5, 0.9]
    Q = len(quantiles)
    keys = jax.random.split(jax.random.PRNGKey(0), 10)

    # 1) Kernel path (f32): several tiles, ragged last tile, megacore surplus.
    B = 128 * 21                                   # 21 rows -> tiles of 8 rows
    preds = jax.random.normal(keys[0], (B, Q), dtype=jnp.float32)
    target = jax.random.normal(keys[1], (B,), dtype=jnp.float32)
    fn_small_tiles = jax.jit(functools.partial(
        quantile_loss, quantiles=quantiles, block_rows=8, min_kernel_batch=0))
    out = jax.block_until_ready(fn_small_tiles(preds, target))
    ref = _quantile_loss_reference(preds, target, quantiles)
    assert jnp.allclose(out, ref, rtol=1e-5, atol=1e-6), (out, ref)

    # 2) Kernel path (f32): default (large-tile) block sizing, single tile.
    B2 = 2048
    p2 = jax.random.normal(keys[2], (B2, Q), dtype=jnp.float32)
    t2 = jax.random.normal(keys[3], (B2,), dtype=jnp.float32)
    fn_default = jax.jit(functools.partial(
        quantile_loss, quantiles=quantiles, min_kernel_batch=0))
    out2 = jax.block_until_ready(fn_default(p2, t2))
    ref2 = _quantile_loss_reference(p2, t2, quantiles)
    assert jnp.allclose(out2, ref2, rtol=1e-5, atol=1e-6), (out2, ref2)

    # 3) Kernel path (bf16 inputs -> bf16 elementwise math, f32 accumulation).
    p3 = jax.random.normal(keys[4], (B2, Q), dtype=jnp.bfloat16)
    t3 = jax.random.normal(keys[5], (B2,), dtype=jnp.bfloat16)
    out3 = jax.block_until_ready(fn_default(p3, t3))
    ref3 = _quantile_loss_reference(p3, t3, quantiles)
    assert jnp.allclose(out3, ref3, rtol=3e-2, atol=3e-3), (out3, ref3)

    # 4) Fallback paths: tiny batch and batch not divisible by 128.
    for i, Bs in enumerate((16, 100)):
        kp, kt = jax.random.split(keys[6 + i])
        ps = jax.random.normal(kp, (Bs, Q), dtype=jnp.float32)
        ts = jax.random.normal(kt, (Bs,), dtype=jnp.float32)
        outs = jax.block_until_ready(quantile_loss(ps, ts, quantiles))
        refs = _quantile_loss_reference(ps, ts, quantiles)
        assert jnp.allclose(outs, refs, rtol=1e-5, atol=1e-6), (Bs, outs, refs)

    print("KERNEL_OK")
</pallas_src>

<mosaic_0001>
module attributes {stable_mosaic.version = 11 : i64} {
  func.func @_pinball_kernel(%arg0: i32, %arg1: i32, %arg2: memref<8x384xf32, #tpu.memory_space<vmem>>, %arg3: memref<8x128xf32, #tpu.memory_space<vmem>>, %arg4: memref<128x384xbf16, #tpu.memory_space<vmem>>, %arg5: memref<8x384xf32, #tpu.memory_space<vmem>>, %arg6: memref<1x8x384xf32, #tpu.memory_space<vmem>>, %arg7: memref<8x384xf32, #tpu.memory_space<vmem>>) attributes {dimension_semantics = [#tpu.dimension_semantics<parallel>, #tpu.dimension_semantics<arbitrary>], iteration_bounds = array<i64: 2, 2>, scalar_prefetch = 0 : i64, scratch_operands = 1 : i64, tpu.core_type = #tpu.core_type<tc>, window_params = [{transform_indices = @transform_0, window_bounds = array<i64: 8, 384>}, {transform_indices = @transform_1, window_bounds = array<i64: 8, 128>}, {pipeline_mode = #tpu.pipeline_mode<synchronous>, transform_indices = @transform_2, window_bounds = array<i64: 128, 384>}, {pipeline_mode = #tpu.pipeline_mode<synchronous>, transform_indices = @transform_3, window_bounds = array<i64: 8, 384>}, {transform_indices = @transform_4, window_bounds = array<i64: 1, 8, 384>}]} {
    %c2_i32 = arith.constant 2 : i32
    %0 = arith.muli %arg0, %c2_i32 : i32
    %1 = arith.addi %0, %arg1 : i32
    %c0_i32 = arith.constant 0 : i32
    %2 = arith.cmpi eq, %arg1, %c0_i32 : i32
    %3 = arith.extui %2 : i1 to i32
    %c0_i32_0 = arith.constant 0 : i32
    %4 = arith.cmpi ne, %3, %c0_i32_0 : i32
    scf.if %4 {
      %cst_15 = arith.constant 0.000000e+00 : f32
      %40 = vector.broadcast %cst_15 : f32 to vector<8x384xf32>
      %c0_16 = arith.constant 0 : index
      %c0_17 = arith.constant 0 : index
      %41 = vector.load %arg7[%c0_16, %c0_17] : memref<8x384xf32, #tpu.memory_space<vmem>>, vector<8x384xf32>
      tpu.vector_store %arg7[%c0_16, %c0_17], %40 {strides = array<i32>} : memref<8x384xf32, #tpu.memory_space<vmem>>, vector<8x384xf32>,
    } else {
    }
    %c0 = arith.constant 0 : index
    %c0_1 = arith.constant 0 : index
    %5 = vector.load %arg4[%c0, %c0_1] : memref<128x384xbf16, #tpu.memory_space<vmem>>, vector<128x384xbf16>
    %c0_2 = arith.constant 0 : index
    %c0_3 = arith.constant 0 : index
    %6 = vector.load %arg3[%c0_2, %c0_3] : memref<8x128xf32, #tpu.memory_space<vmem>>, vector<8x128xf32>
    %7 = arith.truncf %6 : vector<8x128xf32> to vector<8x128xbf16>
    %8 = arith.extf %7 : vector<8x128xbf16> to vector<8x128xf32>
    %9 = arith.subf %6, %8 : vector<8x128xf32>
    %10 = arith.truncf %9 : vector<8x128xf32> to vector<8x128xbf16>
    %11 = arith.extf %10 : vector<8x128xbf16> to vector<8x128xf32>
    %12 = arith.subf %9, %11 : vector<8x128xf32>
    %13 = arith.truncf %12 : vector<8x128xf32> to vector<8x128xbf16>
    %cst = arith.constant dense<0.000000e+00> : vector<8x384xf32>
    %14 = tpu.matmul %7, %5, %cst {dimension_numbers = #tpu.dot_dimension_numbers<[1], [0], [0], [1], [0, 0, 1, 1], [], []>} : vector<8x128xbf16>, vector<128x384xbf16>, vector<8x384xf32> -> vector<8x384xf32>
    %cst_4 = arith.constant dense<0.000000e+00> : vector<8x384xf32>
    %15 = tpu.matmul %10, %5, %cst_4 {dimension_numbers = #tpu.dot_dimension_numbers<[1], [0], [0], [1], [0, 0, 1, 1], [], []>} : vector<8x128xbf16>, vector<128x384xbf16>, vector<8x384xf32> -> vector<8x384xf32>
    %16 = arith.addf %14, %15 : vector<8x384xf32>
    %cst_5 = arith.constant dense<0.000000e+00> : vector<8x384xf32>
    %17 = tpu.matmul %13, %5, %cst_5 {dimension_numbers = #tpu.dot_dimension_numbers<[1], [0], [0], [1], [0, 0, 1, 1], [], []>} : vector<8x128xbf16>, vector<128x384xbf16>, vector<8x384xf32> -> vector<8x384xf32>
    %18 = arith.addf %16, %17 : vector<8x384xf32>
    %c0_6 = arith.constant 0 : index
    %c0_7 = arith.constant 0 : index
    %19 = vector.load %arg2[%c0_6, %c0_7] : memref<8x384xf32, #tpu.memory_space<vmem>>, vector<8x384xf32>
    %20 = vector.shape_cast %19 : vector<8x384xf32> to vector<1x8x384xf32>
    %21 = vector.shape_cast %18 : vector<8x384xf32> to vector<1x8x384xf32>
    %c0_8 = arith.constant 0 : index
    %c0_9 = arith.constant 0 : index
    %22 = vector.load %arg5[%c0_8, %c0_9] : memref<8x384xf32, #tpu.memory_space<vmem>>, vector<8x384xf32>
    %23 = arith.subf %20, %21 : vector<1x8x384xf32>
    %cst_10 = arith.constant 0.000000e+00 : f32
    %24 = vector.broadcast %cst_10 : f32 to vector<1x8x384xf32>
    %25 = arith.maximumf %23, %24 : vector<1x8x384xf32>
    %26 = vector.shape_cast %22 : vector<8x384xf32> to vector<1x8x384xf32>
    %27 = arith.mulf %26, %23 : vector<1x8x384xf32>
    %28 = arith.subf %25, %27 : vector<1x8x384xf32>
    %c8_i32 = arith.constant 8 : i32
    %29 = arith.muli %1, %c8_i32 : i32
    %c21_i32 = arith.constant 21 : i32
    %30 = arith.subi %c21_i32, %29 : i32
    %c8_i32_11 = arith.constant 8 : i32
    %31 = arith.cmpi sge, %30, %c8_i32_11 : i32
    %32 = arith.extui %31 : i1 to i32
    %c0_i32_12 = arith.constant 0 : i32
    %33 = arith.cmpi ne, %32, %c0_i32_12 : i32
    scf.if %33 {
      %c0_15 = arith.constant 0 : index
      %c0_16 = arith.constant 0 : index
      %40 = vector.load %arg7[%c0_15, %c0_16] : memref<8x384xf32, #tpu.memory_space<vmem>>, vector<8x384xf32>
      %cst_17 = arith.constant dense<0.000000e+00> : vector<8x384xf32>
      %41 = vector.multi_reduction <add>, %28, %cst_17 [0] : vector<1x8x384xf32> to vector<8x384xf32>
      %42 = arith.addf %40, %41 : vector<8x384xf32>
      %c0_18 = arith.constant 0 : index
      %c0_19 = arith.constant 0 : index
      %43 = vector.load %arg7[%c0_18, %c0_19] : memref<8x384xf32, #tpu.memory_space<vmem>>, vector<8x384xf32>
      tpu.vector_store %arg7[%c0_18, %c0_19], %42 {strides = array<i32>} : memref<8x384xf32, #tpu.memory_space<vmem>>, vector<8x384xf32>,
    } else {
    }
    %true = arith.constant true
    %34 = arith.xori %31, %true : i1
    %35 = arith.extui %34 : i1 to i32
    %c0_i32_13 = arith.constant 0 : i32
    %36 = arith.cmpi ne, %35, %c0_i32_13 : i32
    scf.if %36 {
      %40 = tpu.iota {dimensions = array<i32: 0>} : vector<1x8x384xi32>
      %41 = tpu.iota {dimensions = array<i32: 1>} : vector<1x8x384xi32>
      %c8_i32_15 = arith.constant 8 : i32
      %42 = vector.broadcast %c8_i32_15 : i32 to vector<1x8x384xi32>
      %43 = arith.muli %40, %42 : vector<1x8x384xi32>
      %44 = arith.addi %43, %41 : vector<1x8x384xi32>
      %45 = vector.broadcast %30 : i32 to vector<1x8x384xi32>
      %46 = arith.cmpi slt, %44, %45 : vector<1x8x384xi32>
      %cst_16 = arith.constant 0.000000e+00 : f32
      %47 = vector.broadcast %cst_16 : f32 to vector<1x8x384xf32>
      %48 = arith.select %46, %28, %47 : vector<1x8x384xi1>, vector<1x8x384xf32>
      %c0_17 = arith.constant 0 : index
      %c0_18 = arith.constant 0 : index
      %49 = vector.load %arg7[%c0_17, %c0_18] : memref<8x384xf32, #tpu.memory_space<vmem>>, vector<8x384xf32>
      %cst_19 = arith.constant dense<0.000000e+00> : vector<8x384xf32>
      %50 = vector.multi_reduction <add>, %48, %cst_19 [0] : vector<1x8x384xf32> to vector<8x384xf32>
      %51 = arith.addf %49, %50 : vector<8x384xf32>
      %c0_20 = arith.constant 0 : index
      %c0_21 = arith.constant 0 : index
      %52 = vector.load %arg7[%c0_20, %c0_21] : memref<8x384xf32, #tpu.memory_space<vmem>>, vector<8x384xf32>
      tpu.vector_store %arg7[%c0_20, %c0_21], %51 {strides = array<i32>} : memref<8x384xf32, #tpu.memory_space<vmem>>, vector<8x384xf32>,
    } else {
    }
    %c1_i32 = arith.constant 1 : i32
    %37 = arith.cmpi eq, %arg1, %c1_i32 : i32
    %38 = arith.extui %37 : i1 to i32
    %c0_i32_14 = arith.constant 0 : i32
    %39 = arith.cmpi ne, %38, %c0_i32_14 : i32
    scf.if %39 {
      %c0_15 = arith.constant 0 : index
      %c0_16 = arith.constant 0 : index
      %40 = vector.load %arg7[%c0_15, %c0_16] : memref<8x384xf32, #tpu.memory_space<vmem>>, vector<8x384xf32>
      %c0_17 = arith.constant 0 : index
      %c0_18 = arith.constant 0 : index
      %c0_19 = arith.constant 0 : index
      %41 = vector.load %arg6[%c0_17, %c0_18, %c0_19] : memref<1x8x384xf32, #tpu.memory_space<vmem>>, vector<1x8x384xf32>
      %42 = vector.shape_cast %41 : vector<1x8x384xf32> to vector<8x384xf32>
      %43 = vector.shape_cast %40 : vector<8x384xf32> to vector<1x8x384xf32>
      tpu.vector_store %arg6[%c0_17, %c0_18, %c0_19], %43 {strides = array<i32>} : memref<1x8x384xf32, #tpu.memory_space<vmem>>, vector<1x8x384xf32>,
    } else {
    }
    return
  }
  func.func @transform_0(%arg0: i32, %arg1: i32) -> (i32, i32) {
    %c2_i32 = arith.constant 2 : i32
    %0 = arith.muli %arg0, %c2_i32 : i32
    %1 = arith.addi %0, %arg1 : i32
    %c2_i32_0 = arith.constant 2 : i32
    %2 = arith.minsi %1, %c2_i32_0 : i32
    %c0_i32 = arith.constant 0 : i32
    %c0_i32_1 = arith.constant 0 : i32
    return %2, %c0_i32 : i32, i32
  }
  func.func @transform_1(%arg0: i32, %arg1: i32) -> (i32, i32) {
    %c2_i32 = arith.constant 2 : i32
    %0 = arith.muli %arg0, %c2_i32 : i32
    %1 = arith.addi %0, %arg1 : i32
    %c2_i32_0 = arith.constant 2 : i32
    %2 = arith.minsi %1, %c2_i32_0 : i32
    %c0_i32 = arith.constant 0 : i32
    %c0_i32_1 = arith.constant 0 : i32
    return %2, %c0_i32 : i32, i32
  }
  func.func @transform_2(%arg0: i32, %arg1: i32) -> (i32, i32) {
    %c0_i32 = arith.constant 0 : i32
    %c0_i32_0 = arith.constant 0 : i32
    %c0_i32_1 = arith.constant 0 : i32
    return %c0_i32, %c0_i32_0 : i32, i32
  }
  func.func @transform_3(%arg0: i32, %arg1: i32) -> (i32, i32) {
    %c0_i32 = arith.constant 0 : i32
    %c0_i32_0 = arith.constant 0 : i32
    %c0_i32_1 = arith.constant 0 : i32
    return %c0_i32, %c0_i32_0 : i32, i32
  }
  func.func @transform_4(%arg0: i32, %arg1: i32) -> (i32, i32, i32) {
    %c0_i32 = arith.constant 0 : i32
    %c0_i32_0 = arith.constant 0 : i32
    %c0_i32_1 = arith.constant 0 : i32
    return %arg0, %c0_i32, %c0_i32_0 : i32, i32, i32
  }
}

</mosaic_0001>

<llo_original>
// kernel: quantile_loss.1
$region0: #{quantile_loss.1}
  #allocation0 [shape = 'u32[]', space=smem, size = 0x4, offset = 0x4, fixed_abs, tag = 'smem constant byte address 0x4 - core index']
  #allocation1 [shape = 'u32[144,128]{1,0:T(1,128)}', space=vmem, size = 0x12000, scoped, tag = 'internal scratch']
  #allocation2 [shape = 'f32[8,384]{1,0:T(8,128)}', space=vmem, size = 0x3000, scoped, tag = 'scratch operand']
  %s0 = inlined_call_operand.vmem [shape: f32[21,384], index: 0, kind: input, shape index: {}]
  %s1 = inlined_call_operand.vmem [shape: f32[21,128], index: 1, kind: input, shape index: {}]
  %s2 = inlined_call_operand.vmem [shape: bf16[128,384], index: 2, kind: input, shape index: {}]
  %s3 = inlined_call_operand.vmem [shape: f32[8,384], index: 3, kind: input, shape index: {}]
  %s4 = inlined_call_operand.vmem [shape: f32[2,8,384], index: 4, kind: output, shape index: {}]
  %s5 = sld [smem:[#allocation0]]
  $region65: #{quantile_loss.1} parent=0
    _
  %s7 = ssub.s32 1, %s5
  %s8 = scalar_select 0, %s7, %s5
  loop: start=0, step=1, limit=6
  $region2: #{quantile_loss.1} parent=0 // loop_pre_header
    _
  $region3: #{quantile_loss.1} parent=0 // loop_header
    %s10 = sphi 0, %s14
    %p11 = scmp.ge.s32.totalorder %s10, 6
    %s17 = sphi 0, %s29
    %s18 = sphi 0, %s25
    %s19 = sphi 0, %s17
    %s20 = sphi 0, %s18
    %s21 = sphi 0, %s19
    %s22 = sphi 0, %s20
    %s40 = sphi 0, %s42
    %s43 = sphi 0, %s40
    %s44 = sphi 0, %s43
    %s60 = sphi 0, %s44
    %s74 = sphi 0, %s76
    %s77 = sphi 0, %s74
    %s78 = sphi 0, %s77
    %s94 = sphi 0, %s78
    %s98 = sphi 0, %s98
    %s100 = sphi 0, %s98
    %s101 = sphi 0, %s100
    %s115 = sphi 0, %s101
    %s119 = sphi 0, %s119
    %s121 = sphi 0, %s119
    %s122 = sphi 0, %s121
    %s136 = sphi 0, %s122
    %s142 = sphi 0, %s144
    %s145 = sphi 0, %s142
    %s146 = sphi 0, %s145
    %s162 = sphi 0, %s146
  $region4: #{quantile_loss.1} parent=0 // loop_header_branch
    %13 = sbr.rel (%p11) target = $region8
  $region5: #{quantile_loss.1} parent=0 // loop_body
    %s15 = ssub.s32 %s10, 1
    %s16 = ssub.s32 %s10, 2
    %s23 = sadd.s32 1, %s18
    %p24 = scmp.ge.s32.totalorder %s23, 2
    %s25 = scalar_select %p24, 0, %s23
    %s26 = sadd.s32 1, %s17
    %s27 = scalar_select %p24, %s26, %s17
    %p28 = scmp.ge.s32.totalorder %s27, 2
    %s29 = scalar_select %p28, 0, %s27
    %s30 = smul.u32 %s17, 2
    %s31 = sadd.s32 %s30, %s18
    %p32 = scmp.lt.s32.totalorder %s31, 2
    %s33 = scalar_select %p32, %s31, 2
    %s34 = smul.u32 %s29, 2
    %s35 = sadd.s32 %s34, %s25
    %p36 = scmp.lt.s32.totalorder %s35, 2
    %s37 = scalar_select %p36, %s35, 2
    %s38 = ssub.s32 %s33, %s37
    %p39 = scmp.eq.s32.totalorder %s38, 0
    %s41 = sadd.s32 %s40, 1
    %s42 = scalar_select %p39, %s40, %s41
    %p45 = pneg %p39
    %p46 = scmp.eq.s32.totalorder %s10, 3
    %p47 = por %p45, %p46
    %p48 = scmp.ne.s32.totalorder %s40, %s43
    %p49 = scmp.eq.s32.totalorder %s10, 0
    %p50 = por %p48, %p49
    %p51 = scmp.ne.s32.totalorder %s40, %s43
    %p52 = scmp.eq.s32.totalorder %s15, 3
    %p53 = por %p51, %p52
    %p54 = scmp.ne.s32.totalorder %s43, %s44
    %p55 = scmp.eq.s32.totalorder %s15, 0
    %p56 = por %p54, %p55
    %p57 = scmp.ne.s32.totalorder %s43, %s44
    %p58 = scmp.eq.s32.totalorder %s16, 3
    %p59 = por %p57, %p58
    %p61 = scmp.ne.s32.totalorder %s44, %s60
    %p62 = scmp.eq.s32.totalorder %s16, 0
    %p63 = por %p61, %p62
    %s64 = smul.u32 %s17, 2
    %s65 = sadd.s32 %s64, %s18
    %p66 = scmp.lt.s32.totalorder %s65, 2
    %s67 = scalar_select %p66, %s65, 2
    %s68 = smul.u32 %s29, 2
    %s69 = sadd.s32 %s68, %s25
    %p70 = scmp.lt.s32.totalorder %s69, 2
    %s71 = scalar_select %p70, %s69, 2
    %s72 = ssub.s32 %s67, %s71
    %p73 = scmp.eq.s32.totalorder %s72, 0
    %s75 = sadd.s32 %s74, 1
    %s76 = scalar_select %p73, %s74, %s75
    %p79 = pneg %p73
    %p80 = scmp.eq.s32.totalorder %s10, 3
    %p81 = por %p79, %p80
    %p82 = scmp.ne.s32.totalorder %s74, %s77
    %p83 = scmp.eq.s32.totalorder %s10, 0
    %p84 = por %p82, %p83
    %p85 = scmp.ne.s32.totalorder %s74, %s77
    %p86 = scmp.eq.s32.totalorder %s15, 3
    %p87 = por %p85, %p86
    %p88 = scmp.ne.s32.totalorder %s77, %s78
    %p89 = scmp.eq.s32.totalorder %s15, 0
    %p90 = por %p88, %p89
    %p91 = scmp.ne.s32.totalorder %s77, %s78
    %p92 = scmp.eq.s32.totalorder %s16, 3
    %p93 = por %p91, %p92
    %p95 = scmp.ne.s32.totalorder %s78, %s94
    %p96 = scmp.eq.s32.totalorder %s16, 0
    %p97 = por %p95, %p96
    %s99 = sadd.s32 %s98, 1
    %p102 = scmp.eq.s32.totalorder %s10, 3
    %p103 = scmp.ne.s32.totalorder %s98, %s100
    %p104 = scmp.eq.s32.totalorder %s10, 0
    %p105 = por %p103, %p104
    %p106 = scmp.ne.s32.totalorder %s98, %s100
    %p107 = scmp.eq.s32.totalorder %s15, 3
    %p108 = por %p106, %p107
    %p109 = scmp.ne.s32.totalorder %s100, %s101
    %p110 = scmp.eq.s32.totalorder %s15, 0
    %p111 = por %p109, %p110
    %p112 = scmp.ne.s32.totalorder %s100, %s101
    %p113 = scmp.eq.s32.totalorder %s16, 3
    %p114 = por %p112, %p113
    %p116 = scmp.ne.s32.totalorder %s101, %s115
    %p117 = scmp.eq.s32.totalorder %s16, 0
    %p118 = por %p116, %p117
    %s120 = sadd.s32 %s119, 1
    %p123 = scmp.eq.s32.totalorder %s10, 3
    %p124 = scmp.ne.s32.totalorder %s119, %s121
    %p125 = scmp.eq.s32.totalorder %s10, 0
    %p126 = por %p124, %p125
    %p127 = scmp.ne.s32.totalorder %s119, %s121
    %p128 = scmp.eq.s32.totalorder %s15, 3
    %p129 = por %p127, %p128
    %p130 = scmp.ne.s32.totalorder %s121, %s122
    %p131 = scmp.eq.s32.totalorder %s15, 0
    %p132 = por %p130, %p131
    %p133 = scmp.ne.s32.totalorder %s121, %s122
    %p134 = scmp.eq.s32.totalorder %s16, 3
    %p135 = por %p133, %p134
    %p137 = scmp.ne.s32.totalorder %s122, %s136
    %p138 = scmp.eq.s32.totalorder %s16, 0
    %p139 = por %p137, %p138
    %s140 = ssub.s32 %s17, %s29
    %p141 = scmp.eq.s32.totalorder %s140, 0
    %s143 = sadd.s32 %s142, 1
    %s144 = scalar_select %p141, %s142, %s143
    %p147 = pneg %p141
    %p148 = scmp.eq.s32.totalorder %s10, 3
    %p149 = por %p147, %p148
    %p150 = scmp.ne.s32.totalorder %s142, %s145
    %p151 = scmp.eq.s32.totalorder %s10, 0
    %p152 = por %p150, %p151
    %p153 = scmp.ne.s32.totalorder %s142, %s145
    %p154 = scmp.eq.s32.totalorder %s15, 3
    %p155 = por %p153, %p154
    %p156 = scmp.ne.s32.totalorder %s145, %s146
    %p157 = scmp.eq.s32.totalorder %s15, 0
    %p158 = por %p156, %p157
    %p159 = scmp.ne.s32.totalorder %s145, %s146
    %p160 = scmp.eq.s32.totalorder %s16, 3
    %p161 = por %p159, %p160
    %p163 = scmp.ne.s32.totalorder %s146, %s162
    %p164 = scmp.eq.s32.totalorder %s16, 0
    %p165 = por %p163, %p164
    %p166 = scmp.le.s32.totalorder 1, %s10
    %p167 = scmp.lt.s32.totalorder %s10, 5
    %p168 = pnand %p166, %p167
    %p169 = pneg %p168
    // Predicated region
    $region9: #{quantile_loss.1} parent=5 // pred_check
      _
    $region10: #{quantile_loss.1} parent=5 // pred_check_branch
      %171 = sbr.rel (%p168) target = $region12
    $region11: #{quantile_loss.1} parent=5 // pred_region
      %s172 = ssub.s32 %s10, 1
      // Predicated region
      $region13: #{quantile_loss.1} parent=11 // pred_check
        %p173 = pneg %p111
      $region14: #{quantile_loss.1} parent=11 // pred_check_branch
        %175 = sbr.rel (%p173) target = $region16
      $region15: #{quantile_loss.1} parent=11 // pred_region
        _
      $region16: #{quantile_loss.1} parent=11 // pred_fallthru
        _
      // Predicated region
      $region17: #{quantile_loss.1} parent=11 // pred_check
        %p176 = pneg %p132
      $region18: #{quantile_loss.1} parent=11 // pred_check_branch
        %178 = sbr.rel (%p176) target = $region20
      $region19: #{quantile_loss.1} parent=11 // pred_region
        _
      $region20: #{quantile_loss.1} parent=11 // pred_fallthru
        _
    $region12: #{quantile_loss.1} parent=5 // pred_fallthru
      _
    %p179 = scmp.lt.s32.totalorder %s10, 4
    // Predicated region
    $region21: #{quantile_loss.1} parent=5 // pred_check
      %p180 = pneg %p179
    $region22: #{quantile_loss.1} parent=5 // pred_check_branch
      %182 = sbr.rel (%p180) target = $region24
    $region23: #{quantile_loss.1} parent=5 // pred_region
      // Predicated region
      $region25: #{quantile_loss.1} parent=23 // pred_check
        %p183 = pneg %p50
      $region26: #{quantile_loss.1} parent=23 // pred_check_branch
        %185 = sbr.rel (%p183) target = $region28
      $region27: #{quantile_loss.1} parent=23 // pred_region
        %s186 = smul.u32 %s17, 2
        %s187 = sadd.s32 %s186, %s18
        %p188 = scmp.lt.s32.totalorder %s187, 2
        %s189 = scalar_select %p188, %s187, 2
        %p190 = scmp.lt.s32.totalorder %s189, 2
        %s191 = scalar_select %p190, %s189, 2
        %s192 = smul.addr %s191, 3
        %s193 = smul.addr %s192, 8
        %s194 = scalar_lea.vmem %s0, %s193
        %s195 = smul.u32 %s17, 2
        %s196 = sadd.s32 %s195, %s18
        %p197 = scmp.lt.s32.totalorder %s196, 2
        %s198 = scalar_select %p197, %s196, 2
      $region28: #{quantile_loss.1} parent=23 // pred_fallthru
        _
      // Predicated region
      $region29: #{quantile_loss.1} parent=23 // pred_check
        %p199 = pneg %p84
      $region30: #{quantile_loss.1} parent=23 // pred_check_branch
        %201 = sbr.rel (%p199) target = $region32
      $region31: #{quantile_loss.1} parent=23 // pred_region
        %s202 = smul.u32 %s17, 2
        %s203 = sadd.s32 %s202, %s18
        %p204 = scmp.lt.s32.totalorder %s203, 2
        %s205 = scalar_select %p204, %s203, 2
        %p206 = scmp.lt.s32.totalorder %s205, 2
        %s207 = scalar_select %p206, %s205, 2
        %s208 = smul.addr %s207, 8
        %s209 = scalar_lea.vmem %s1, %s208
        %s210 = smul.u32 %s17, 2
        %s211 = sadd.s32 %s210, %s18
        %p212 = scmp.lt.s32.totalorder %s211, 2
        %s213 = scalar_select %p212, %s211, 2
      $region32: #{quantile_loss.1} parent=23 // pred_fallthru
        _
    $region24: #{quantile_loss.1} parent=5 // pred_fallthru
      _
    %p214 = scmp.le.s32.totalorder 1, %s10
    %p215 = scmp.lt.s32.totalorder %s10, 5
    %p216 = pnand %p214, %p215
    %p217 = pneg %p216
    // Predicated region
    $region33: #{quantile_loss.1} parent=5 // pred_check
      _
    $region34: #{quantile_loss.1} parent=5 // pred_check_branch
      %219 = sbr.rel (%p216) target = $region36
    $region35: #{quantile_loss.1} parent=5 // pred_region
      %s220 = ssub.s32 %s10, 1
      %s221 = smul.u32 %s19, 2
      %s222 = sadd.s32 %s221, %s20
      %p223 = scmp.lt.s32.totalorder %s222, 2
      %s224 = scalar_select %p223, %s222, 2
      %p225 = scmp.lt.s32.totalorder %s224, 2
      %s226 = scalar_select %p225, %s224, 2
      %s227 = smul.addr %s226, 3
      %s228 = smul.addr %s227, 8
      %s229 = scalar_lea.vmem %s0, %s228
      %p230 = pneg %p56
      %p231 = pneg %p53
      %s232 = smul.u32 %s19, 2
      %s233 = sadd.s32 %s232, %s20
      %p234 = scmp.lt.s32.totalorder %s233, 2
      %s235 = scalar_select %p234, %s233, 2
      %p236 = scmp.lt.s32.totalorder %s235, 2
      %s237 = scalar_select %p236, %s235, 2
      %s238 = smul.addr %s237, 8
      %s239 = scalar_lea.vmem %s1, %s238
      %p240 = pneg %p90
      %p241 = pneg %p87
      %p242 = pneg %p111
      %p243 = pneg %p108
      %p244 = pneg %p132
      %p245 = pneg %p129
      %p246 = pneg %p158
      %p247 = pneg %p155
      %p248 = scmp.lt.s32.totalorder %s19, 1
      %s249 = scalar_select %p248, %s19, 1
      %s250 = smul.addr %s249, 3
      %s251 = smul.addr %s250, 8
      %s252 = scalar_lea.vmem %s4, %s251
      %s253 = smul.u32 %s19, 2
      %s254 = sadd.s32 %s253, %s20
      %p255 = scmp.lt.s32.totalorder %s254, 2
      %s256 = scalar_select %p255, %s254, 2
      %p257 = scmp.lt.s32.totalorder %s256, 2
      %s258 = scalar_select %p257, %s256, 2
      %s259 = smul.addr %s258, 3
      %s260 = smul.addr %s259, 8
      %s261 = scalar_lea.vmem %s0, %s260
      %s262 = smul.u32 %s19, 2
      %s263 = sadd.s32 %s262, %s20
      %p264 = scmp.lt.s32.totalorder %s263, 2
      %s265 = scalar_select %p264, %s263, 2
      %s266 = smul.u32 %s19, 2
      %s267 = sadd.s32 %s266, %s20
      %p268 = scmp.lt.s32.totalorder %s267, 2
      %s269 = scalar_select %p268, %s267, 2
      %p270 = scmp.lt.s32.totalorder %s269, 2
      %s271 = scalar_select %p270, %s269, 2
      %s272 = smul.addr %s271, 8
      %s273 = scalar_lea.vmem %s1, %s272
      %s274 = smul.u32 %s19, 2
      %s275 = sadd.s32 %s274, %s20
      %p276 = scmp.lt.s32.totalorder %s275, 2
      %s277 = scalar_select %p276, %s275, 2
      %p278 = scmp.lt.s32.totalorder %s19, 1
      %s279 = scalar_select %p278, %s19, 1
      %s280 = smul.addr %s279, 3
      %s281 = smul.addr %s280, 8
      %s282 = scalar_lea.vmem %s4, %s281
      %s284 = smul.u32 %s19, 2
      %s285 = sadd.s32 %s284, %s20
      %p286 = scmp.eq.s32.totalorder %s20, 0
      // Predicated region
      $region37: #{quantile_loss.1} parent=35 // pred_check
        %p287 = pneg %p286
      $region38: #{quantile_loss.1} parent=35 // pred_check_branch
        %289 = sbr.rel (%p287) target = $region40
      $region39: #{quantile_loss.1} parent=35 // pred_region
        %290 = vst [vmem:[#allocation2] sm:$0xff] 0.0
        %291 = vst [vmem:[#allocation2 + $0x8] sm:$0xff] 0.0
        %292 = vst [vmem:[#allocation2 + $0x10] sm:$0xff] 0.0
      $region40: #{quantile_loss.1} parent=35 // pred_fallthru
        _
      %v293 = vld [vmem:[%s2] sm:$0xff]
      %v294 = vld [vmem:[%s2 + $0x8] sm:$0xf]
      %v295 = vld [vmem:[%s2 + $0xc] sm:$0xff]
      %v296 = vld [vmem:[%s2 + $0x14] sm:$0xf]
      %v297 = vld [vmem:[%s2 + $0x18] sm:$0xff]
      %v298 = vld [vmem:[%s2 + $0x20] sm:$0xf]
      %v299 = vld [vmem:[%s2 + $0x24] sm:$0xff]
      %v300 = vld [vmem:[%s2 + $0x2c] sm:$0xf]
      %v301 = vld [vmem:[%s2 + $0x30] sm:$0xff]
      %v302 = vld [vmem:[%s2 + $0x38] sm:$0xf]
      %v303 = vld [vmem:[%s2 + $0x3c] sm:$0xff]
      %v304 = vld [vmem:[%s2 + $0x44] sm:$0xf]
      %v305 = vld [vmem:[%s2 + $0x48] sm:$0xff]
      %v306 = vld [vmem:[%s2 + $0x50] sm:$0xf]
      %v307 = vld [vmem:[%s2 + $0x54] sm:$0xff]
      %v308 = vld [vmem:[%s2 + $0x5c] sm:$0xf]
      %v309 = vld [vmem:[%s2 + $0x60] sm:$0xff]
      %v310 = vld [vmem:[%s2 + $0x68] sm:$0xf]
      %v311 = vld [vmem:[%s2 + $0x6c] sm:$0xff]
      %v312 = vld [vmem:[%s2 + $0x74] sm:$0xf]
      %v313 = vld [vmem:[%s2 + $0x78] sm:$0xff]
      %v314 = vld [vmem:[%s2 + $0x80] sm:$0xf]
      %v315 = vld [vmem:[%s2 + $0x84] sm:$0xff]
      %v316 = vld [vmem:[%s2 + $0x8c] sm:$0xf]
      %v317 = vld [vmem:[%s2 + $0x90] sm:$0xff]
      %v318 = vld [vmem:[%s2 + $0x98] sm:$0xf]
      %v319 = vld [vmem:[%s2 + $0x9c] sm:$0xff]
      %v320 = vld [vmem:[%s2 + $0xa4] sm:$0xf]
      %v321 = vld [vmem:[%s2 + $0xa8] sm:$0xff]
      %v322 = vld [vmem:[%s2 + $0xb0] sm:$0xf]
      %v323 = vld [vmem:[%s2 + $0xb4] sm:$0xff]
      %v324 = vld [vmem:[%s2 + $0xbc] sm:$0xf]
      %v325 = vld [vmem:[%s273] sm:$0xff]
      %v326 = vpack.c.bf16 %v325, %v325
      %v327 = vunpack.c.l.bf16 %v326
      %v328 = vsub.f32 %v325, %v327
      %v329 = vpack.c.bf16 %v328, %v328
      %v330 = vunpack.c.l.bf16 %v329
      %v331 = vsub.f32 %v328, %v330
      %v332 = vpack.c.bf16 %v331, %v331
      %v365 = vunpack.c.l.b16 %v293
      %v366 = vunpack.c.h.b16 %v293
      %v367 = vunpack.c.l.b16 %v294
      %v368 = vunpack.c.l.b16 %v295
      %v369 = vunpack.c.h.b16 %v295
      %v370 = vunpack.c.l.b16 %v296
      %v371 = vunpack.c.l.b16 %v297
      %v372 = vunpack.c.h.b16 %v297
      %v373 = vunpack.c.l.b16 %v298
      %v374 = vunpack.c.l.b16 %v299
      %v375 = vunpack.c.h.b16 %v299
      %v376 = vunpack.c.l.b16 %v300
      %v377 = vunpack.c.l.b16 %v301
      %v378 = vunpack.c.h.b16 %v301
      %v379 = vunpack.c.l.b16 %v302
      %v380 = vunpack.c.l.b16 %v303
      %v381 = vunpack.c.h.b16 %v303
      %v382 = vunpack.c.l.b16 %v304
      %v383 = vunpack.c.l.b16 %v305
      %v384 = vunpack.c.h.b16 %v305
      %v385 = vunpack.c.l.b16 %v306
      %v386 = vunpack.c.l.b16 %v307
      %v387 = vunpack.c.h.b16 %v307
      %v388 = vunpack.c.l.b16 %v308
      %v389 = vunpack.c.l.b16 %v309
      %v390 = vunpack.c.h.b16 %v309
      %v391 = vunpack.c.l.b16 %v310
      %v392 = vunpack.c.l.b16 %v311
      %v393 = vunpack.c.h.b16 %v311
      %v394 = vunpack.c.l.b16 %v312
      %v395 = vunpack.c.l.b16 %v313
      %v396 = vunpack.c.h.b16 %v313
      %v397 = vunpack.c.l.b16 %v314
      %v398 = vunpack.c.l.b16 %v315
      %v399 = vunpack.c.h.b16 %v315
      %v400 = vunpack.c.l.b16 %v316
      %v401 = vunpack.c.l.b16 %v317
      %v402 = vunpack.c.h.b16 %v317
      %v403 = vunpack.c.l.b16 %v318
      %v404 = vunpack.c.l.b16 %v319
      %v405 = vunpack.c.h.b16 %v319
      %v406 = vunpack.c.l.b16 %v320
      %v407 = vunpack.c.l.b16 %v321
      %v408 = vunpack.c.h.b16 %v321
      %v409 = vunpack.c.l.b16 %v322
      %v410 = vunpack.c.l.b16 %v323
      %v411 = vunpack.c.h.b16 %v323
      %v412 = vunpack.c.l.b16 %v324
      %v413 = vpack.c.b16 %v368, %v365
      %v414 = vpack.c.b16 %v369, %v366
      %v415 = vpack.c.b16 %v370, %v367
      %v416 = vpack.c.b16 %v374, %v371
      %v417 = vpack.c.b16 %v375, %v372
      %v418 = vpack.c.b16 %v376, %v373
      %v419 = vpack.c.b16 %v380, %v377
      %v420 = vpack.c.b16 %v381, %v378
      %v421 = vpack.c.b16 %v382, %v379
      %v422 = vpack.c.b16 %v386, %v383
      %v423 = vpack.c.b16 %v387, %v384
      %v424 = vpack.c.b16 %v388, %v385
      %v425 = vpack.c.b16 %v392, %v389
      %v426 = vpack.c.b16 %v393, %v390
      %v427 = vpack.c.b16 %v394, %v391
      %v428 = vpack.c.b16 %v398, %v395
      %v429 = vpack.c.b16 %v399, %v396
      %v430 = vpack.c.b16 %v400, %v397
      %v431 = vpack.c.b16 %v404, %v401
      %v432 = vpack.c.b16 %v405, %v402
      %v433 = vpack.c.b16 %v406, %v403
      %v434 = vpack.c.b16 %v410, %v407
      %v435 = vpack.c.b16 %v411, %v408
      %v436 = vpack.c.b16 %v412, %v409
      %461 = vmatprep.subr.bf16.mxu0 %v414
      %462 = vmatpush1.bf16.msra.mxu0 %v413
      %463 = vmatprep.subr.bf16.mxu0 %v417
      %464 = vmatpush1.bf16.msra.mxu0 %v416
      %465 = vmatprep.subr.bf16.mxu0 %v420
      %466 = vmatpush1.bf16.msra.mxu0 %v419
      %467 = vmatprep.subr.bf16.mxu0 %v423
      %468 = vmatpush1.bf16.msra.mxu0 %v422
      %469 = vmatprep.subr.bf16.mxu0 %v426
      %470 = vmatpush1.bf16.msra.mxu0 %v425
      %471 = vmatprep.subr.bf16.mxu0 %v429
      %472 = vmatpush1.bf16.msra.mxu0 %v428
      %473 = vmatprep.subr.bf16.mxu0 %v432
      %474 = vmatpush1.bf16.msra.mxu0 %v431
      %475 = vmatprep.subr.bf16.mxu0 %v435
      %476 = vmatpush1.bf16.msra.mxu0 %v434
      %477 = vmatprep.subr.bf16.mxu0 0
      %478 = vmatpush1.bf16.msra.mxu0 0
      %479 = vmatprep.subr.bf16.mxu0 0
      %480 = vmatpush1.bf16.msra.mxu0 0
      %481 = vmatprep.subr.bf16.mxu0 0
      %482 = vmatpush1.bf16.msra.mxu0 0
      %483 = vmatprep.subr.bf16.mxu0 0
      %484 = vmatpush1.bf16.msra.mxu0 0
      %485 = vmatprep.subr.bf16.mxu0 0
      %486 = vmatpush1.bf16.msra.mxu0 0
      %487 = vmatprep.subr.bf16.mxu0 0
      %488 = vmatpush1.bf16.msra.mxu0 0
      %489 = vmatprep.subr.bf16.mxu0 0
      %490 = vmatpush1.bf16.msra.mxu0 0
      %491 = vmatprep.subr.bf16.mxu0 0
      %492 = vmatpush1.bf16.msra.mxu0 0
      %493 = vmatprep.mubr.bf16.mxu0 0
      %494 = vmatmul.mubr.bf16.gmra.mrb[0].mxu0 %v329
      %v495 = vpop.f32.mrb[0].mxu0
      %v496 = vadd.f32 0.0, %v495
      %v497 = vpop.f32.mrb[0].mxu0
      %v498 = vadd.f32 0.0, %v497
      %v499 = vpop.f32.mrb[0].mxu0
      %v500 = vpop.f32.mrb[0].mxu0
      %501 = vdwg.mxu0
      %502 = vmatprep.subr.bf16.mxu0 0
      %503 = vmatpush1.bf16.msra.mxu0 %v415
      %504 = vmatprep.subr.bf16.mxu0 0
      %505 = vmatpush1.bf16.msra.mxu0 %v418
      %506 = vmatprep.subr.bf16.mxu0 0
      %507 = vmatpush1.bf16.msra.mxu0 %v421
      %508 = vmatprep.subr.bf16.mxu0 0
      %509 = vmatpush1.bf16.msra.mxu0 %v424
      %510 = vmatprep.subr.bf16.mxu0 0
      %511 = vmatpush1.bf16.msra.mxu0 %v427
      %512 = vmatprep.subr.bf16.mxu0 0
      %513 = vmatpush1.bf16.msra.mxu0 %v430
      %514 = vmatprep.subr.bf16.mxu0 0
      %515 = vmatpush1.bf16.msra.mxu0 %v433
      %516 = vmatprep.subr.bf16.mxu0 0
      %517 = vmatpush1.bf16.msra.mxu0 %v436
      %518 = vmatprep.subr.bf16.mxu0 0
      %519 = vmatpush1.bf16.msra.mxu0 0
      %520 = vmatprep.subr.bf16.mxu0 0
      %521 = vmatpush1.bf16.msra.mxu0 0
      %522 = vmatprep.subr.bf16.mxu0 0
      %523 = vmatpush1.bf16.msra.mxu0 0
      %524 = vmatprep.subr.bf16.mxu0 0
      %525 = vmatpush1.bf16.msra.mxu0 0
      %526 = vmatprep.subr.bf16.mxu0 0
      %527 = vmatpush1.bf16.msra.mxu0 0
      %528 = vmatprep.subr.bf16.mxu0 0
      %529 = vmatpush1.bf16.msra.mxu0 0
      %530 = vmatprep.subr.bf16.mxu0 0
      %531 = vmatpush1.bf16.msra.mxu0 0
      %532 = vmatprep.subr.bf16.mxu0 0
      %533 = vmatpush1.bf16.msra.mxu0 0
      %534 = vmatprep.mubr.bf16.mxu0 0
      %535 = vmatmul.mubr.bf16.gmra.mrb[0].mxu0 %v329
      %v536 = vpop.f32.mrb[0].mxu0
      %v537 = vadd.f32 0.0, %v536
      %v538 = vpop.f32.mrb[0].mxu0
      %v539 = vpop.f32.mrb[0].mxu0
      %v540 = vpop.f32.mrb[0].mxu0
      %541 = vdwg.mxu0
      %542 = vmatprep.subr.bf16.mxu0 %v414
      %543 = vmatpush1.bf16.msra.mxu0 %v413
      %544 = vmatprep.subr.bf16.mxu0 %v417
      %545 = vmatpush1.bf16.msra.mxu0 %v416
      %546 = vmatprep.subr.bf16.mxu0 %v420
      %547 = vmatpush1.bf16.msra.mxu0 %v419
      %548 = vmatprep.subr.bf16.mxu0 %v423
      %549 = vmatpush1.bf16.msra.mxu0 %v422
      %550 = vmatprep.subr.bf16.mxu0 %v426
      %551 = vmatpush1.bf16.msra.mxu0 %v425
      %552 = vmatprep.subr.bf16.mxu0 %v429
      %553 = vmatpush1.bf16.msra.mxu0 %v428
      %554 = vmatprep.subr.bf16.mxu0 %v432
      %555 = vmatpush1.bf16.msra.mxu0 %v431
      %556 = vmatprep.subr.bf16.mxu0 %v435
      %557 = vmatpush1.bf16.msra.mxu0 %v434
      %558 = vmatprep.subr.bf16.mxu0 0
      %559 = vmatpush1.bf16.msra.mxu0 0
      %560 = vmatprep.subr.bf16.mxu0 0
      %561 = vmatpush1.bf16.msra.mxu0 0
      %562 = vmatprep.subr.bf16.mxu0 0
      %563 = vmatpush1.bf16.msra.mxu0 0
      %564 = vmatprep.subr.bf16.mxu0 0
      %565 = vmatpush1.bf16.msra.mxu0 0
      %566 = vmatprep.subr.bf16.mxu0 0
      %567 = vmatpush1.bf16.msra.mxu0 0
      %568 = vmatprep.subr.bf16.mxu0 0
      %569 = vmatpush1.bf16.msra.mxu0 0
      %570 = vmatprep.subr.bf16.mxu0 0
      %571 = vmatpush1.bf16.msra.mxu0 0
      %572 = vmatprep.subr.bf16.mxu0 0
      %573 = vmatpush1.bf16.msra.mxu0 0
      %574 = vmatprep.mubr.bf16.mxu0 0
      %575 = vmatmul.mubr.bf16.gmra.mrb[0].mxu0 %v326
      %v576 = vpop.f32.mrb[0].mxu0
      %v577 = vadd.f32 %v496, %v576
      %v578 = vpop.f32.mrb[0].mxu0
      %v579 = vadd.f32 %v498, %v578
      %v580 = vpop.f32.mrb[0].mxu0
      %v581 = vpop.f32.mrb[0].mxu0
      %582 = vdwg.mxu0
      %583 = vmatprep.subr.bf16.mxu0 0
      %584 = vmatpush1.bf16.msra.mxu0 %v415
      %585 = vmatprep.subr.bf16.mxu0 0
      %586 = vmatpush1.bf16.msra.mxu0 %v418
      %587 = vmatprep.subr.bf16.mxu0 0
      %588 = vmatpush1.bf16.msra.mxu0 %v421
      %589 = vmatprep.subr.bf16.mxu0 0
      %590 = vmatpush1.bf16.msra.mxu0 %v424
      %591 = vmatprep.subr.bf16.mxu0 0
      %592 = vmatpush1.bf16.msra.mxu0 %v427
      %593 = vmatprep.subr.bf16.mxu0 0
      %594 = vmatpush1.bf16.msra.mxu0 %v430
      %595 = vmatprep.subr.bf16.mxu0 0
      %596 = vmatpush1.bf16.msra.mxu0 %v433
      %597 = vmatprep.subr.bf16.mxu0 0
      %598 = vmatpush1.bf16.msra.mxu0 %v436
      %599 = vmatprep.subr.bf16.mxu0 0
      %600 = vmatpush1.bf16.msra.mxu0 0
      %601 = vmatprep.subr.bf16.mxu0 0
      %602 = vmatpush1.bf16.msra.mxu0 0
      %603 = vmatprep.subr.bf16.mxu0 0
      %604 = vmatpush1.bf16.msra.mxu0 0
      %605 = vmatprep.subr.bf16.mxu0 0
      %606 = vmatpush1.bf16.msra.mxu0 0
      %607 = vmatprep.subr.bf16.mxu0 0
      %608 = vmatpush1.bf16.msra.mxu0 0
      %609 = vmatprep.subr.bf16.mxu0 0
      %610 = vmatpush1.bf16.msra.mxu0 0
      %611 = vmatprep.subr.bf16.mxu0 0
      %612 = vmatpush1.bf16.msra.mxu0 0
      %613 = vmatprep.subr.bf16.mxu0 0
      %614 = vmatpush1.bf16.msra.mxu0 0
      %615 = vmatprep.mubr.bf16.mxu0 0
      %616 = vmatmul.mubr.bf16.gmra.mrb[0].mxu0 %v326
      %v617 = vpop.f32.mrb[0].mxu0
      %v618 = vadd.f32 %v537, %v617
      %v619 = vpop.f32.mrb[0].mxu0
      %v620 = vpop.f32.mrb[0].mxu0
      %v621 = vpop.f32.mrb[0].mxu0
      %622 = vdwg.mxu0
      %623 = vmatprep.subr.bf16.mxu0 %v414
      %624 = vmatpush1.bf16.msra.mxu0 %v413
      %625 = vmatprep.subr.bf16.mxu0 %v417
      %626 = vmatpush1.bf16.msra.mxu0 %v416
      %627 = vmatprep.subr.bf16.mxu0 %v420
      %628 = vmatpush1.bf16.msra.mxu0 %v419
      %629 = vmatprep.subr.bf16.mxu0 %v423
      %630 = vmatpush1.bf16.msra.mxu0 %v422
      %631 = vmatprep.subr.bf16.mxu0 %v426
      %632 = vmatpush1.bf16.msra.mxu0 %v425
      %633 = vmatprep.subr.bf16.mxu0 %v429
      %634 = vmatpush1.bf16.msra.mxu0 %v428
      %635 = vmatprep.subr.bf16.mxu0 %v432
      %636 = vmatpush1.bf16.msra.mxu0 %v431
      %637 = vmatprep.subr.bf16.mxu0 %v435
      %638 = vmatpush1.bf16.msra.mxu0 %v434
      %639 = vmatprep.subr.bf16.mxu0 0
      %640 = vmatpush1.bf16.msra.mxu0 0
      %641 = vmatprep.subr.bf16.mxu0 0
      %642 = vmatpush1.bf16.msra.mxu0 0
      %643 = vmatprep.subr.bf16.mxu0 0
      %644 = vmatpush1.bf16.msra.mxu0 0
      %645 = vmatprep.subr.bf16.mxu0 0
      %646 = vmatpush1.bf16.msra.mxu0 0
      %647 = vmatprep.subr.bf16.mxu0 0
      %648 = vmatpush1.bf16.msra.mxu0 0
      %649 = vmatprep.subr.bf16.mxu0 0
      %650 = vmatpush1.bf16.msra.mxu0 0
      %651 = vmatprep.subr.bf16.mxu0 0
      %652 = vmatpush1.bf16.msra.mxu0 0
      %653 = vmatprep.subr.bf16.mxu0 0
      %654 = vmatpush1.bf16.msra.mxu0 0
      %655 = vmatprep.mubr.bf16.mxu0 0
      %656 = vmatmul.mubr.bf16.gmra.mrb[0].mxu0 %v332
      %v657 = vpop.f32.mrb[0].mxu0
      %v658 = vadd.f32 0.0, %v657
      %v659 = vpop.f32.mrb[0].mxu0
      %v660 = vadd.f32 0.0, %v659
      %v661 = vpop.f32.mrb[0].mxu0
      %v662 = vpop.f32.mrb[0].mxu0
      %663 = vdwg.mxu0
      %664 = vmatprep.subr.bf16.mxu0 0
      %665 = vmatpush1.bf16.msra.mxu0 %v415
      %666 = vmatprep.subr.bf16.mxu0 0
      %667 = vmatpush1.bf16.msra.mxu0 %v418
      %668 = vmatprep.subr.bf16.mxu0 0
      %669 = vmatpush1.bf16.msra.mxu0 %v421
      %670 = vmatprep.subr.bf16.mxu0 0
      %671 = vmatpush1.bf16.msra.mxu0 %v424
      %672 = vmatprep.subr.bf16.mxu0 0
      %673 = vmatpush1.bf16.msra.mxu0 %v427
      %674 = vmatprep.subr.bf16.mxu0 0
      %675 = vmatpush1.bf16.msra.mxu0 %v430
      %676 = vmatprep.subr.bf16.mxu0 0
      %677 = vmatpush1.bf16.msra.mxu0 %v433
      %678 = vmatprep.subr.bf16.mxu0 0
      %679 = vmatpush1.bf16.msra.mxu0 %v436
      %680 = vmatprep.subr.bf16.mxu0 0
      %681 = vmatpush1.bf16.msra.mxu0 0
      %682 = vmatprep.subr.bf16.mxu0 0
      %683 = vmatpush1.bf16.msra.mxu0 0
      %684 = vmatprep.subr.bf16.mxu0 0
      %685 = vmatpush1.bf16.msra.mxu0 0
      %686 = vmatprep.subr.bf16.mxu0 0
      %687 = vmatpush1.bf16.msra.mxu0 0
      %688 = vmatprep.subr.bf16.mxu0 0
      %689 = vmatpush1.bf16.msra.mxu0 0
      %690 = vmatprep.subr.bf16.mxu0 0
      %691 = vmatpush1.bf16.msra.mxu0 0
      %692 = vmatprep.subr.bf16.mxu0 0
      %693 = vmatpush1.bf16.msra.mxu0 0
      %694 = vmatprep.subr.bf16.mxu0 0
      %695 = vmatpush1.bf16.msra.mxu0 0
      %696 = vmatprep.mubr.bf16.mxu0 0
      %697 = vmatmul.mubr.bf16.gmra.mrb[0].mxu0 %v332
      %v698 = vpop.f32.mrb[0].mxu0
      %v699 = vadd.f32 0.0, %v698
      %v700 = vpop.f32.mrb[0].mxu0
      %v701 = vpop.f32.mrb[0].mxu0
      %v702 = vpop.f32.mrb[0].mxu0
      %703 = vdwg.mxu0
      %v704 = vadd.f32 %v577, %v658
      %v705 = vadd.f32 %v579, %v660
      %v706 = vadd.f32 %v618, %v699
      %v707 = vld [vmem:[%s261] sm:$0xff]
      %v708 = vld [vmem:[%s261 + $0x8] sm:$0xff]
      %v709 = vld [vmem:[%s261 + $0x10] sm:$0xff]
      %v710 = vld [vmem:[%s3] sm:$0xff]
      %v711 = vld [vmem:[%s3 + $0x8] sm:$0xff]
      %v712 = vld [vmem:[%s3 + $0x10] sm:$0xff]
      %v713 = vsub.f32 %v707, %v704
      %v714 = vsub.f32 %v708, %v705
      %v715 = vsub.f32 %v709, %v706
      %v716 = vmax.f32 %v713, 0.0
      %v717 = vmax.f32 %v714, 0.0
      %v718 = vmax.f32 %v715, 0.0
      %v719 = vmul.f32 %v710, %v713
      %v720 = vmul.f32 %v711, %v714
      %v721 = vmul.f32 %v712, %v715
      %v722 = vsub.f32 %v716, %v719
      %v723 = vsub.f32 %v717, %v720
      %v724 = vsub.f32 %v718, %v721
      %s725 = smul.u32 %s285, 8
      %s726 = ssub.s32 21, %s725
      %p727 = scmp.ge.s32.totalorder %s726, 8
      // Predicated region
      $region41: #{quantile_loss.1} parent=35 // pred_check
        %p728 = pneg %p727
      $region42: #{quantile_loss.1} parent=35 // pred_check_branch
        %730 = sbr.rel (%p728) target = $region44
      $region43: #{quantile_loss.1} parent=35 // pred_region
        %v731 = vld [vmem:[#allocation2] sm:$0xff]
        %v732 = vld [vmem:[#allocation2 + $0x8] sm:$0xff]
        %v733 = vld [vmem:[#allocation2 + $0x10] sm:$0xff]
        %v734 = vadd.f32 %v722, 0.0
        %v735 = vadd.f32 %v723, 0.0
        %v736 = vadd.f32 %v724, 0.0
        %v737 = vadd.f32 %v731, %v734
        %v738 = vadd.f32 %v732, %v735
        %v739 = vadd.f32 %v733, %v736
        %740 = vst [vmem:[#allocation2] sm:$0xff] %v737
        %741 = vst [vmem:[#allocation2 + $0x8] sm:$0xff] %v738
        %742 = vst [vmem:[#allocation2 + $0x10] sm:$0xff] %v739
      $region44: #{quantile_loss.1} parent=35 // pred_fallthru
        _
      %p743 = scmp.lt.s32.totalorder %s726, 8
      // Predicated region
      $region45: #{quantile_loss.1} parent=35 // pred_check
        %p744 = pneg %p743
      $region46: #{quantile_loss.1} parent=35 // pred_check_branch
        %746 = sbr.rel (%p744) target = $region48
      $region47: #{quantile_loss.1} parent=35 // pred_region
        %v747 = vlaneseq
        %v748 = vshrl.u32 %v747, 7
        %v749 = vstv %s726
        %vm750 = vcmp.lt.s32.totalorder %v748, %v749
        %v751 = vsel %vm750, %v722, 0.0
        %v752 = vsel %vm750, %v723, 0.0
        %v753 = vsel %vm750, %v724, 0.0
        %v754 = vld [vmem:[#allocation2] sm:$0xff]
        %v755 = vld [vmem:[#allocation2 + $0x8] sm:$0xff]
        %v756 = vld [vmem:[#allocation2 + $0x10] sm:$0xff]
        %v757 = vadd.f32 %v751, 0.0
        %v758 = vadd.f32 %v752, 0.0
        %v759 = vadd.f32 %v753, 0.0
        %v760 = vadd.f32 %v754, %v757
        %v761 = vadd.f32 %v755, %v758
        %v762 = vadd.f32 %v756, %v759
        %763 = vst [vmem:[#allocation2] sm:$0xff] %v760
        %764 = vst [vmem:[#allocation2 + $0x8] sm:$0xff] %v761
        %765 = vst [vmem:[#allocation2 + $0x10] sm:$0xff] %v762
      $region48: #{quantile_loss.1} parent=35 // pred_fallthru
        _
      %p766 = scmp.eq.s32.totalorder %s20, 1
      // Predicated region
      $region49: #{quantile_loss.1} parent=35 // pred_check
        %p767 = pneg %p766
      $region50: #{quantile_loss.1} parent=35 // pred_check_branch
        %769 = sbr.rel (%p767) target = $region52
      $region51: #{quantile_loss.1} parent=35 // pred_region
        %v770 = vld [vmem:[#allocation2] sm:$0xff]
        %v771 = vld [vmem:[#allocation2 + $0x8] sm:$0xff]
        %v772 = vld [vmem:[#allocation2 + $0x10] sm:$0xff]
        %773 = vst [vmem:[%s282] sm:$0xff] %v770
        %774 = vst [vmem:[%s282 + $0x8] sm:$0xff] %v771
        %775 = vst [vmem:[%s282 + $0x10] sm:$0xff] %v772
      $region52: #{quantile_loss.1} parent=35 // pred_fallthru
        _
      %p776 = scmp.lt.s32.totalorder %s19, 1
      %s777 = scalar_select %p776, %s19, 1
      %s778 = smul.addr %s777, 3
      %s779 = smul.addr %s778, 8
      %s780 = scalar_lea.vmem %s4, %s779
      // Predicated region
      $region53: #{quantile_loss.1} parent=35 // pred_check
        %p781 = pneg %p155
      $region54: #{quantile_loss.1} parent=35 // pred_check_branch
        %783 = sbr.rel (%p781) target = $region56
      $region55: #{quantile_loss.1} parent=35 // pred_region
        _
      $region56: #{quantile_loss.1} parent=35 // pred_fallthru
        _
    $region36: #{quantile_loss.1} parent=5 // pred_fallthru
      _
    %p784 = scmp.le.s32.totalorder 2, %s10
    // Predicated region
    $region57: #{quantile_loss.1} parent=5 // pred_check
      %p785 = pneg %p784
    $region58: #{quantile_loss.1} parent=5 // pred_check_branch
      %787 = sbr.rel (%p785) target = $region60
    $region59: #{quantile_loss.1} parent=5 // pred_region
      %s788 = ssub.s32 %s10, 2
      // Predicated region
      $region61: #{quantile_loss.1} parent=59 // pred_check
        %p789 = pneg %p161
      $region62: #{quantile_loss.1} parent=59 // pred_check_branch
        %791 = sbr.rel (%p789) target = $region64
      $region63: #{quantile_loss.1} parent=59 // pred_region
        %p792 = scmp.lt.s32.totalorder %s21, 1
        %s793 = scalar_select %p792, %s21, 1
        %s794 = smul.addr %s793, 3
        %s795 = smul.addr %s794, 8
        %s796 = scalar_lea.vmem %s4, %s795
      $region64: #{quantile_loss.1} parent=59 // pred_fallthru
        _
    $region60: #{quantile_loss.1} parent=5 // pred_fallthru
      _
  $region6: #{quantile_loss.1} parent=0 // loop_footer
    %s14 = sadd.s32 1, %s10
  $region7: #{quantile_loss.1} parent=0 // loop_footer_branch
    %9 = sbr.rel target = $region3
  $region8: #{quantile_loss.1} parent=0 // loop_exit
    _

</llo_original>
